<compile_context>
chip_gen: v5e
topology: v5e:2x2
jax: 0.10.0
libtpu: 0.0.40
codegen_flags: <defaults>
</compile_context>

<pallas_src>
import jax
import jax.numpy as jnp
from jax import lax
from jax.experimental import pallas as pl
from jax.experimental.pallas import tpu as pltpu

_PH = 8  # top/bottom halo rows in the staged-input scratch (>=2 required; 8 keeps stores aligned)


def _double_conv_kernel(x_ref, w1_ref, b1_ref, w2_ref, b2_ref, out_ref, xpad_ref):
    # x_ref   : (H, W*Cin)            lane-dense full image for batch element n (resident across rb)
    # w1_ref  : (3, W*Cin,  W*Cmid)   banded conv1 weights (BN1 scale folded in), one band per dy
    # b1_ref  : (1, W*Cmid)           BN1 bias, tiled over W
    # w2_ref  : (3, W*Cmid, W*Cout)   banded conv2 weights (BN2 scale folded in)
    # b2_ref  : (1, W*Cout)           BN2 bias, tiled over W
    # out_ref : (TH, W*Cout)          output rows [rb*TH, rb*TH + TH)
    # xpad_ref: (2*_PH + H, W*Cin)    VMEM scratch: input with zero halo rows along H
    rb = pl.program_id(1)
    H = x_ref.shape[0]
    TH, WCout = out_ref.shape
    WCmid = w1_ref.shape[2]

    # Stage the image once per batch element: zero only the halo rows, aligned body store.
    @pl.when(rb == 0)
    def _stage():
        xpad_ref[0:_PH, :] = jnp.zeros((_PH, x_ref.shape[1]), jnp.float32)
        xpad_ref[_PH + H:_PH + H + _PH, :] = jnp.zeros((_PH, x_ref.shape[1]), jnp.float32)
        xpad_ref[_PH:_PH + H, :] = x_ref[...]

    r0 = rb * TH                  # first output row of this block
    base = _PH + r0 - 2           # xpad row corresponding to global input row r0 - 2

    # ---- conv1 (+ BN1 bias + ReLU): mid rows [r0-1, r0+TH+1) ----
    acc1 = jnp.zeros((TH + 2, WCmid), jnp.float32)
    for dy in range(3):
        xs = xpad_ref[pl.ds(base + dy, TH + 2), :]
        acc1 = acc1 + jnp.dot(xs, w1_ref[dy], preferred_element_type=jnp.float32)
    # Rows outside the image are conv2's zero padding -> force them to exactly 0 (branch-free).
    grow = r0 - 1 + lax.broadcasted_iota(jnp.int32, (TH + 2, 1), 0)
    inside = (grow >= 0) & (grow < H)
    mid = jnp.where(inside, jnp.maximum(acc1 + b1_ref[...], 0.0), 0.0)

    # ---- conv2 (+ BN2 bias + ReLU): output rows [r0, r0+TH) ----
    acc2 = jnp.zeros((TH, WCout), jnp.float32)
    for dy in range(3):
        acc2 = acc2 + jnp.dot(mid[dy:dy + TH, :], w2_ref[dy],
                              preferred_element_type=jnp.float32)
    out_ref[...] = jnp.maximum(acc2 + b2_ref[...], 0.0).astype(out_ref.dtype)


def _band_weights(w_hwio, width):
    """(3,3,Cin,Cout) HWIO kernel -> (3, W*Cin, W*Cout) banded matrices (W padding built in)."""
    kh, kw, cin, cout = w_hwio.shape
    wi = jnp.arange(width)[:, None]     # input  column index
    wo = jnp.arange(width)[None, :]     # output column index
    dx = wi - wo + 1                    # kernel column tap
    valid = (dx >= 0) & (dx <= kw - 1)
    dxc = jnp.clip(dx, 0, kw - 1)
    b = w_hwio[:, dxc, :, :]            # (kh, W, W, Cin, Cout)
    b = b * valid[None, :, :, None, None].astype(w_hwio.dtype)
    # index layout: [dy, wi*Cin + ci, wo*Cout + co]
    return jnp.transpose(b, (0, 1, 3, 2, 4)).reshape(kh, width * cin, width * cout)


def _pick_row_block(h):
    # Largest multiple-of-8 divisor of H that still gives >= 2 row blocks (pipelining); else H.
    for th in (128, 64, 32, 16, 8):
        if h % th == 0 and h // th >= 2:
            return th
    return h


def double_conv_2d(x_nchw, w1, s1, b1, w2, s2, b2):
    """x_nchw: (N, Cin, H, W) f32; w*: (3,3,Cin,C*) HWIO; s*/b*: folded BN scale/bias (C*,)."""
    N, Cin, H, W = x_nchw.shape
    Cmid = w1.shape[-1]
    Cout = w2.shape[-1]

    # Fold BN scale into conv weights -> kernel epilogue is bias + ReLU only.
    band1 = _band_weights(w1 * s1, W)             # (3, W*Cin,  W*Cmid)
    band2 = _band_weights(w2 * s2, W)             # (3, W*Cmid, W*Cout)
    bias1 = jnp.tile(b1, W).reshape(1, W * Cmid)
    bias2 = jnp.tile(b2, W).reshape(1, W * Cout)

    # Lane-dense activation layout: (N, H, W*Cin); no HBM-side spatial padding pass.
    x_flat = jnp.transpose(x_nchw, (0, 2, 3, 1)).reshape(N, H, W * Cin)

    TH = _pick_row_block(H)
    grid = (N, H // TH)

    out_flat = pl.pallas_call(
        _double_conv_kernel,
        out_shape=jax.ShapeDtypeStruct((N, H, W * Cout), jnp.float32),
        grid=grid,
        in_specs=[
            pl.BlockSpec((None, H, W * Cin), lambda n, rb: (n, 0, 0)),      # full image, reused across rb
            pl.BlockSpec((3, W * Cin, W * Cmid), lambda n, rb: (0, 0, 0)),
            pl.BlockSpec((1, W * Cmid), lambda n, rb: (0, 0)),
            pl.BlockSpec((3, W * Cmid, W * Cout), lambda n, rb: (0, 0, 0)),
            pl.BlockSpec((1, W * Cout), lambda n, rb: (0, 0)),
        ],
        out_specs=pl.BlockSpec((None, TH, W * Cout), lambda n, rb: (n, rb, 0)),
        scratch_shapes=[pltpu.VMEM((2 * _PH + H, W * Cin), jnp.float32)],
        compiler_params=pltpu.CompilerParams(
            dimension_semantics=("parallel", "arbitrary"),   # batch across TCs (v7x); rows sequential
            vmem_limit_bytes=32 * 1024 * 1024,
        ),
    )(x_flat, band1, bias1, band2, bias2)

    return jnp.transpose(out_flat.reshape(N, H, W, Cout), (0, 3, 1, 2))


def _reference(x_nchw, w1, s1, b1, w2, s2, b2):
    """Pure-JAX reference (lax conv) for correctness checking."""
    dn = ("NHWC", "HWIO", "NHWC")
    x = jnp.transpose(x_nchw, (0, 2, 3, 1))
    y = lax.conv_general_dilated(x, w1, (1, 1), "SAME", dimension_numbers=dn)
    y = jnp.maximum(y * s1 + b1, 0.0)
    y = lax.conv_general_dilated(y, w2, (1, 1), "SAME", dimension_numbers=dn)
    y = jnp.maximum(y * s2 + b2, 0.0)
    return jnp.transpose(y, (0, 3, 1, 2))


def _fold_bn(gamma, beta, mean, var, eps=1e-5):
    scale = gamma / jnp.sqrt(var + eps)
    bias = beta - mean * scale
    return scale, bias


if __name__ == "__main__":
    key = jax.random.PRNGKey(0)
    N, Cin, H, W = 2, 4, 16, 16
    Cmid = Cout = 8  # DoubleConv_2d(in_channels=4, out_channels=8) -> mid_channels=8

    ks = jax.random.split(key, 9)
    x = jax.random.normal(ks[0], (N, Cin, H, W), jnp.float32)

    # conv weights (HWIO), deterministic init
    w1 = jax.random.normal(ks[1], (3, 3, Cin, Cmid), jnp.float32) * 0.1
    w2 = jax.random.normal(ks[2], (3, 3, Cmid, Cout), jnp.float32) * 0.1

    # BatchNorm params / running stats (eval mode), deterministic init
    g1 = 1.0 + 0.1 * jax.random.normal(ks[3], (Cmid,), jnp.float32)
    be1 = 0.1 * jax.random.normal(ks[4], (Cmid,), jnp.float32)
    m1 = 0.1 * jax.random.normal(ks[5], (Cmid,), jnp.float32)
    v1 = 1.0 + 0.1 * jnp.abs(jax.random.normal(ks[6], (Cmid,), jnp.float32))
    g2 = jnp.ones((Cout,), jnp.float32)
    be2 = jnp.zeros((Cout,), jnp.float32)
    m2 = 0.05 * jax.random.normal(ks[7], (Cout,), jnp.float32)
    v2 = 1.0 + 0.1 * jnp.abs(jax.random.normal(ks[8], (Cout,), jnp.float32))

    s1, b1 = _fold_bn(g1, be1, m1, v1)
    s2, b2 = _fold_bn(g2, be2, m2, v2)

    out = double_conv_2d(x, w1, s1, b1, w2, s2, b2)
    out = jax.block_until_ready(out)

    ref = _reference(x, w1, s1, b1, w2, s2, b2)
    assert out.shape == (N, Cout, H, W)
    assert jnp.allclose(out, ref, atol=1e-4, rtol=1e-4), float(jnp.max(jnp.abs(out - ref)))

    print("KERNEL_OK")
</pallas_src>

<mosaic_0001>
module attributes {stable_mosaic.version = 11 : i64} {
  func.func @_double_conv_kernel(%arg0: i32, %arg1: i32, %arg2: memref<1x16x64xf32, #tpu.memory_space<vmem>>, %arg3: memref<3x64x128xf32, #tpu.memory_space<vmem>>, %arg4: memref<1x128xf32, #tpu.memory_space<vmem>>, %arg5: memref<3x128x128xf32, #tpu.memory_space<vmem>>, %arg6: memref<1x128xf32, #tpu.memory_space<vmem>>, %arg7: memref<1x8x128xf32, #tpu.memory_space<vmem>>, %arg8: memref<32x64xf32, #tpu.memory_space<vmem>>) attributes {dimension_semantics = [#tpu.dimension_semantics<parallel>, #tpu.dimension_semantics<arbitrary>], iteration_bounds = array<i64: 2, 2>, scalar_prefetch = 0 : i64, scratch_operands = 1 : i64, tpu.core_type = #tpu.core_type<tc>, window_params = [{transform_indices = @transform_0, window_bounds = array<i64: 1, 16, 64>}, {pipeline_mode = #tpu.pipeline_mode<synchronous>, transform_indices = @transform_1, window_bounds = array<i64: 3, 64, 128>}, {pipeline_mode = #tpu.pipeline_mode<synchronous>, transform_indices = @transform_2, window_bounds = array<i64: 1, 128>}, {pipeline_mode = #tpu.pipeline_mode<synchronous>, transform_indices = @transform_3, window_bounds = array<i64: 3, 128, 128>}, {pipeline_mode = #tpu.pipeline_mode<synchronous>, transform_indices = @transform_4, window_bounds = array<i64: 1, 128>}, {transform_indices = @transform_5, window_bounds = array<i64: 1, 8, 128>}]} {
    %c0_i32 = arith.constant 0 : i32
    %0 = arith.cmpi eq, %arg1, %c0_i32 : i32
    %1 = arith.extui %0 : i1 to i32
    %c0_i32_0 = arith.constant 0 : i32
    %2 = arith.cmpi ne, %1, %c0_i32_0 : i32
    scf.if %2 {
      %cst_41 = arith.constant 0.000000e+00 : f32
      %70 = vector.broadcast %cst_41 : f32 to vector<8x64xf32>
      %c0_42 = arith.constant 0 : index
      %c0_43 = arith.constant 0 : index
      %71 = vector.load %arg8[%c0_42, %c0_43] : memref<32x64xf32, #tpu.memory_space<vmem>>, vector<8x64xf32>
      tpu.vector_store %arg8[%c0_42, %c0_43], %70 {strides = array<i32>} : memref<32x64xf32, #tpu.memory_space<vmem>>, vector<8x64xf32>,
      %cst_44 = arith.constant 0.000000e+00 : f32
      %72 = vector.broadcast %cst_44 : f32 to vector<8x64xf32>
      %c24 = arith.constant 24 : index
      %c0_45 = arith.constant 0 : index
      %73 = vector.load %arg8[%c24, %c0_45] : memref<32x64xf32, #tpu.memory_space<vmem>>, vector<8x64xf32>
      tpu.vector_store %arg8[%c24, %c0_45], %72 {strides = array<i32>} : memref<32x64xf32, #tpu.memory_space<vmem>>, vector<8x64xf32>,
      %c0_46 = arith.constant 0 : index
      %c0_47 = arith.constant 0 : index
      %c0_48 = arith.constant 0 : index
      %74 = vector.load %arg2[%c0_46, %c0_47, %c0_48] : memref<1x16x64xf32, #tpu.memory_space<vmem>>, vector<1x16x64xf32>
      %75 = vector.shape_cast %74 : vector<1x16x64xf32> to vector<16x64xf32>
      %c8 = arith.constant 8 : index
      %c0_49 = arith.constant 0 : index
      %76 = vector.load %arg8[%c8, %c0_49] : memref<32x64xf32, #tpu.memory_space<vmem>>, vector<16x64xf32>
      tpu.vector_store %arg8[%c8, %c0_49], %75 {strides = array<i32>} : memref<32x64xf32, #tpu.memory_space<vmem>>, vector<16x64xf32>,
    } else {
    }
    %c8_i32 = arith.constant 8 : i32
    %3 = arith.muli %arg1, %c8_i32 : i32
    %c8_i32_1 = arith.constant 8 : i32
    %4 = arith.addi %c8_i32_1, %3 : i32
    %c2_i32 = arith.constant 2 : i32
    %5 = arith.subi %4, %c2_i32 : i32
    %cst = arith.constant 0.000000e+00 : f32
    %6 = vector.broadcast %cst : f32 to vector<10x128xf32>
    %c0_i32_2 = arith.constant 0 : i32
    %7 = arith.addi %5, %c0_i32_2 : i32
    %8 = arith.index_cast %7 : i32 to index
    %c0 = arith.constant 0 : index
    %9 = vector.load %arg8[%8, %c0] : memref<32x64xf32, #tpu.memory_space<vmem>>, vector<10x64xf32>
    %c0_3 = arith.constant 0 : index
    %c0_4 = arith.constant 0 : index
    %c0_5 = arith.constant 0 : index
    %10 = vector.load %arg3[%c0_3, %c0_4, %c0_5] : memref<3x64x128xf32, #tpu.memory_space<vmem>>, vector<1x64x128xf32>
    %11 = vector.shape_cast %10 : vector<1x64x128xf32> to vector<64x128xf32>
    %cst_6 = arith.constant dense<0.000000e+00> : vector<10x128xf32>
    %12 = tpu.matmul %9, %11, %cst_6 {dimension_numbers = #tpu.dot_dimension_numbers<[1], [0], [0], [1], [0, 0, 1, 1], [], []>} : vector<10x64xf32>, vector<64x128xf32>, vector<10x128xf32> -> vector<10x128xf32>
    %13 = arith.addf %6, %12 : vector<10x128xf32>
    %c1_i32 = arith.constant 1 : i32
    %14 = arith.addi %5, %c1_i32 : i32
    %15 = arith.index_cast %14 : i32 to index
    %c0_7 = arith.constant 0 : index
    %16 = vector.load %arg8[%15, %c0_7] : memref<32x64xf32, #tpu.memory_space<vmem>>, vector<10x64xf32>
    %c1 = arith.constant 1 : index
    %c0_8 = arith.constant 0 : index
    %c0_9 = arith.constant 0 : index
    %17 = vector.load %arg3[%c1, %c0_8, %c0_9] : memref<3x64x128xf32, #tpu.memory_space<vmem>>, vector<1x64x128xf32>
    %18 = vector.shape_cast %17 : vector<1x64x128xf32> to vector<64x128xf32>
    %cst_10 = arith.constant dense<0.000000e+00> : vector<10x128xf32>
    %19 = tpu.matmul %16, %18, %cst_10 {dimension_numbers = #tpu.dot_dimension_numbers<[1], [0], [0], [1], [0, 0, 1, 1], [], []>} : vector<10x64xf32>, vector<64x128xf32>, vector<10x128xf32> -> vector<10x128xf32>
    %20 = arith.addf %13, %19 : vector<10x128xf32>
    %c2_i32_11 = arith.constant 2 : i32
    %21 = arith.addi %5, %c2_i32_11 : i32
    %22 = arith.index_cast %21 : i32 to index
    %c0_12 = arith.constant 0 : index
    %23 = vector.load %arg8[%22, %c0_12] : memref<32x64xf32, #tpu.memory_space<vmem>>, vector<10x64xf32>
    %c2 = arith.constant 2 : index
    %c0_13 = arith.constant 0 : index
    %c0_14 = arith.constant 0 : index
    %24 = vector.load %arg3[%c2, %c0_13, %c0_14] : memref<3x64x128xf32, #tpu.memory_space<vmem>>, vector<1x64x128xf32>
    %25 = vector.shape_cast %24 : vector<1x64x128xf32> to vector<64x128xf32>
    %cst_15 = arith.constant dense<0.000000e+00> : vector<10x128xf32>
    %26 = tpu.matmul %23, %25, %cst_15 {dimension_numbers = #tpu.dot_dimension_numbers<[1], [0], [0], [1], [0, 0, 1, 1], [], []>} : vector<10x64xf32>, vector<64x128xf32>, vector<10x128xf32> -> vector<10x128xf32>
    %27 = arith.addf %20, %26 : vector<10x128xf32>
    %c1_i32_16 = arith.constant 1 : i32
    %28 = arith.subi %3, %c1_i32_16 : i32
    %29 = tpu.iota {dimensions = array<i32: 0>} : vector<10x1xi32>
    %30 = vector.broadcast %28 : i32 to vector<10x1xi32>
    %31 = arith.addi %30, %29 : vector<10x1xi32>
    %c0_i32_17 = arith.constant 0 : i32
    %32 = vector.broadcast %c0_i32_17 : i32 to vector<10x1xi32>
    %33 = arith.cmpi sge, %31, %32 : vector<10x1xi32>
    %c16_i32 = arith.constant 16 : i32
    %34 = vector.broadcast %c16_i32 : i32 to vector<10x1xi32>
    %35 = arith.cmpi slt, %31, %34 : vector<10x1xi32>
    %36 = arith.andi %33, %35 : vector<10x1xi1>
    %c0_18 = arith.constant 0 : index
    %c0_19 = arith.constant 0 : index
    %37 = vector.load %arg4[%c0_18, %c0_19] : memref<1x128xf32, #tpu.memory_space<vmem>>, vector<1x128xf32>
    %38 = vector.broadcast %37 : vector<1x128xf32> to vector<10x128xf32>
    %39 = arith.addf %27, %38 : vector<10x128xf32>
    %cst_20 = arith.constant 0.000000e+00 : f32
    %40 = vector.broadcast %cst_20 : f32 to vector<10x128xf32>
    %41 = arith.maximumf %39, %40 : vector<10x128xf32>
    %cst_21 = arith.constant 0.000000e+00 : f32
    %42 = vector.shape_cast %36 : vector<10x1xi1> to vector<10x1xi1>
    %43 = vector.broadcast %42 : vector<10x1xi1> to vector<10x128xi1>
    %44 = vector.broadcast %cst_21 : f32 to vector<10x128xf32>
    %45 = arith.select %43, %41, %44 : vector<10x128xi1>, vector<10x128xf32>
    %cst_22 = arith.constant 0.000000e+00 : f32
    %46 = vector.broadcast %cst_22 : f32 to vector<8x128xf32>
    %47 = vector.extract_strided_slice %45 {offsets = [0, 0], sizes = [8, 128], strides = [1, 1]} : vector<10x128xf32> to vector<8x128xf32>
    %c0_23 = arith.constant 0 : index
    %c0_24 = arith.constant 0 : index
    %c0_25 = arith.constant 0 : index
    %48 = vector.load %arg5[%c0_23, %c0_24, %c0_25] : memref<3x128x128xf32, #tpu.memory_space<vmem>>, vector<1x128x128xf32>
    %49 = vector.shape_cast %48 : vector<1x128x128xf32> to vector<128x128xf32>
    %cst_26 = arith.constant dense<0.000000e+00> : vector<8x128xf32>
    %50 = tpu.matmul %47, %49, %cst_26 {dimension_numbers = #tpu.dot_dimension_numbers<[1], [0], [0], [1], [0, 0, 1, 1], [], []>} : vector<8x128xf32>, vector<128x128xf32>, vector<8x128xf32> -> vector<8x128xf32>
    %51 = arith.addf %46, %50 : vector<8x128xf32>
    %52 = vector.extract_strided_slice %45 {offsets = [1, 0], sizes = [8, 128], strides = [1, 1]} : vector<10x128xf32> to vector<8x128xf32>
    %c1_27 = arith.constant 1 : index
    %c0_28 = arith.constant 0 : index
    %c0_29 = arith.constant 0 : index
    %53 = vector.load %arg5[%c1_27, %c0_28, %c0_29] : memref<3x128x128xf32, #tpu.memory_space<vmem>>, vector<1x128x128xf32>
    %54 = vector.shape_cast %53 : vector<1x128x128xf32> to vector<128x128xf32>
    %cst_30 = arith.constant dense<0.000000e+00> : vector<8x128xf32>
    %55 = tpu.matmul %52, %54, %cst_30 {dimension_numbers = #tpu.dot_dimension_numbers<[1], [0], [0], [1], [0, 0, 1, 1], [], []>} : vector<8x128xf32>, vector<128x128xf32>, vector<8x128xf32> -> vector<8x128xf32>
    %56 = arith.addf %51, %55 : vector<8x128xf32>
    %57 = vector.extract_strided_slice %45 {offsets = [2, 0], sizes = [8, 128], strides = [1, 1]} : vector<10x128xf32> to vector<8x128xf32>
    %c2_31 = arith.constant 2 : index
    %c0_32 = arith.constant 0 : index
    %c0_33 = arith.constant 0 : index
    %58 = vector.load %arg5[%c2_31, %c0_32, %c0_33] : memref<3x128x128xf32, #tpu.memory_space<vmem>>, vector<1x128x128xf32>
    %59 = vector.shape_cast %58 : vector<1x128x128xf32> to vector<128x128xf32>
    %cst_34 = arith.constant dense<0.000000e+00> : vector<8x128xf32>
    %60 = tpu.matmul %57, %59, %cst_34 {dimension_numbers = #tpu.dot_dimension_numbers<[1], [0], [0], [1], [0, 0, 1, 1], [], []>} : vector<8x128xf32>, vector<128x128xf32>, vector<8x128xf32> -> vector<8x128xf32>
    %61 = arith.addf %56, %60 : vector<8x128xf32>
    %c0_35 = arith.constant 0 : index
    %c0_36 = arith.constant 0 : index
    %62 = vector.load %arg6[%c0_35, %c0_36] : memref<1x128xf32, #tpu.memory_space<vmem>>, vector<1x128xf32>
    %63 = vector.broadcast %62 : vector<1x128xf32> to vector<8x128xf32>
    %64 = arith.addf %61, %63 : vector<8x128xf32>
    %cst_37 = arith.constant 0.000000e+00 : f32
    %65 = vector.broadcast %cst_37 : f32 to vector<8x128xf32>
    %66 = arith.maximumf %64, %65 : vector<8x128xf32>
    %c0_38 = arith.constant 0 : index
    %c0_39 = arith.constant 0 : index
    %c0_40 = arith.constant 0 : index
    %67 = vector.load %arg7[%c0_38, %c0_39, %c0_40] : memref<1x8x128xf32, #tpu.memory_space<vmem>>, vector<1x8x128xf32>
    %68 = vector.shape_cast %67 : vector<1x8x128xf32> to vector<8x128xf32>
    %69 = vector.shape_cast %66 : vector<8x128xf32> to vector<1x8x128xf32>
    tpu.vector_store %arg7[%c0_38, %c0_39, %c0_40], %69 {strides = array<i32>} : memref<1x8x128xf32, #tpu.memory_space<vmem>>, vector<1x8x128xf32>,
    return
  }
  func.func @transform_0(%arg0: i32, %arg1: i32) -> (i32, i32, i32) {
    %c0_i32 = arith.constant 0 : i32
    %c0_i32_0 = arith.constant 0 : i32
    %c0_i32_1 = arith.constant 0 : i32
    return %arg0, %c0_i32, %c0_i32_0 : i32, i32, i32
  }
  func.func @transform_1(%arg0: i32, %arg1: i32) -> (i32, i32, i32) {
    %c0_i32 = arith.constant 0 : i32
    %c0_i32_0 = arith.constant 0 : i32
    %c0_i32_1 = arith.constant 0 : i32
    %c0_i32_2 = arith.constant 0 : i32
    return %c0_i32, %c0_i32_0, %c0_i32_1 : i32, i32, i32
  }
  func.func @transform_2(%arg0: i32, %arg1: i32) -> (i32, i32) {
    %c0_i32 = arith.constant 0 : i32
    %c0_i32_0 = arith.constant 0 : i32
    %c0_i32_1 = arith.constant 0 : i32
    return %c0_i32, %c0_i32_0 : i32, i32
  }
  func.func @transform_3(%arg0: i32, %arg1: i32) -> (i32, i32, i32) {
    %c0_i32 = arith.constant 0 : i32
    %c0_i32_0 = arith.constant 0 : i32
    %c0_i32_1 = arith.constant 0 : i32
    %c0_i32_2 = arith.constant 0 : i32
    return %c0_i32, %c0_i32_0, %c0_i32_1 : i32, i32, i32
  }
  func.func @transform_4(%arg0: i32, %arg1: i32) -> (i32, i32) {
    %c0_i32 = arith.constant 0 : i32
    %c0_i32_0 = arith.constant 0 : i32
    %c0_i32_1 = arith.constant 0 : i32
    return %c0_i32, %c0_i32_0 : i32, i32
  }
  func.func @transform_5(%arg0: i32, %arg1: i32) -> (i32, i32, i32) {
    %c0_i32 = arith.constant 0 : i32
    %c0_i32_0 = arith.constant 0 : i32
    return %arg0, %arg1, %c0_i32 : i32, i32, i32
  }
}

</mosaic_0001>

<llo_original>
// kernel: tpu_custom_call.1
$region0: #{tpu_custom_call.1}
  #allocation0 [shape = 'u32[]', space=smem, size = 0x4, offset = 0x4, fixed_abs, tag = 'smem constant byte address 0x4 - core index']
  #allocation1 [shape = 'u32[72,128]{1,0:T(1,128)}', space=vmem, size = 0x9000, scoped, tag = 'internal scratch']
  #allocation2 [shape = 'f32[32,64]{1,0:T(8,128)}', space=vmem, size = 0x4000, scoped, tag = 'scratch operand']
  %s0 = inlined_call_operand.hbm [shape: f32[2,16,64], index: 0, kind: input, shape index: {}]
  %s1 = inlined_call_operand.hbm [shape: f32[3,64,128], index: 1, kind: input, shape index: {}]
  %s2 = inlined_call_operand.vmem [shape: f32[1,128], index: 2, kind: input, shape index: {}]
  %s3 = inlined_call_operand.hbm [shape: f32[3,128,128], index: 3, kind: input, shape index: {}]
  %s4 = inlined_call_operand.vmem [shape: f32[1,128], index: 4, kind: input, shape index: {}]
  %s5 = inlined_call_operand.hbm [shape: f32[2,16,128], index: 5, kind: output, shape index: {}]
  %s6 = sld [smem:[#allocation0]]
  $region69: #{tpu_custom_call.1} parent=0
    _
  %s8 = ssub.s32 1, %s6
  %s9 = scalar_select 0, %s8, %s6
  $region1: #{tpu_custom_call.1} parent=0
    #allocation3 [shape = 'u8[16384]{0}', space=vmem, size = 0x4000, scoped, tag = 'input window, operand 0']
    #allocation4 [shape = 's32[2]{0}', space=sflag, size = 0x8, scoped, tag = 'scoped memory for tpu_custom_call.1']
    #allocation5 [shape = 's32[2]{0}', space=sflag, size = 0x8, scoped, tag = 'scoped memory for tpu_custom_call.1']
    #allocation6 [shape = 'u8[98304]{0}', space=vmem, size = 0x18000, scoped, tag = 'input window, operand 1, single buffered']
    #allocation7 [shape = 's32[1]{0}', space=sflag, size = 0x4, scoped, tag = 'scoped memory for tpu_custom_call.1']
    #allocation8 [shape = 'u8[196608]{0}', space=vmem, size = 0x30000, scoped, tag = 'input window, operand 3, single buffered']
    #allocation9 [shape = 'u8[8192]{0}', space=vmem, size = 0x2000, scoped, tag = 'output window, operand 0']
    %10 = vsyncpa [#allocation4], 0
    %s11 = scalar_lea.sflag [#allocation4], 1
    %12 = vsyncpa %s11, 0
    %13 = vsyncpa [#allocation7], 0
    %14 = vsyncpa [#allocation5], 0
    %s15 = scalar_lea.sflag [#allocation5], 1
    %16 = vsyncpa %s15, 0
    loop: start=0, step=1, limit=6
    $region2: #{tpu_custom_call.1} parent=1 // loop_pre_header
      _
    $region3: #{tpu_custom_call.1} parent=1 // loop_header
      %s18 = sphi 0, %s22
      %p19 = scmp.ge.s32.totalorder %s18, 6
      %s25 = sphi 0, %s37
      %s26 = sphi 0, %s33
      %s27 = sphi 0, %s25
      %s28 = sphi 0, %s26
      %s29 = sphi 0, %s27
      %s30 = sphi 0, %s28
      %s40 = sphi 0, %s42
      %s43 = sphi 0, %s40
      %s44 = sphi 0, %s43
      %s60 = sphi 0, %s44
      %s64 = sphi 0, %s64
      %s66 = sphi 0, %s64
      %s67 = sphi 0, %s66
      %s81 = sphi 0, %s67
      %s85 = sphi 0, %s85
      %s87 = sphi 0, %s85
      %s88 = sphi 0, %s87
      %s102 = sphi 0, %s88
      %s106 = sphi 0, %s106
      %s108 = sphi 0, %s106
      %s109 = sphi 0, %s108
      %s123 = sphi 0, %s109
      %s127 = sphi 0, %s127
      %s129 = sphi 0, %s127
      %s130 = sphi 0, %s129
      %s144 = sphi 0, %s130
      %s152 = sphi 0, %s154
      %s155 = sphi 0, %s152
      %s156 = sphi 0, %s155
      %s172 = sphi 0, %s156
    $region4: #{tpu_custom_call.1} parent=1 // loop_header_branch
      %21 = sbr.rel (%p19) target = $region8
    $region5: #{tpu_custom_call.1} parent=1 // loop_body
      %s23 = ssub.s32 %s18, 1
      %s24 = ssub.s32 %s18, 2
      %s31 = sadd.s32 1, %s26
      %p32 = scmp.ge.s32.totalorder %s31, 2
      %s33 = scalar_select %p32, 0, %s31
      %s34 = sadd.s32 1, %s25
      %s35 = scalar_select %p32, %s34, %s25
      %p36 = scmp.ge.s32.totalorder %s35, 2
      %s37 = scalar_select %p36, 0, %s35
      %s38 = ssub.s32 %s25, %s37
      %p39 = scmp.eq.s32.totalorder %s38, 0
      %s41 = sadd.s32 %s40, 1
      %s42 = scalar_select %p39, %s40, %s41
      %p45 = pneg %p39
      %p46 = scmp.eq.s32.totalorder %s18, 3
      %p47 = por %p45, %p46
      %p48 = scmp.ne.s32.totalorder %s40, %s43
      %p49 = scmp.eq.s32.totalorder %s18, 0
      %p50 = por %p48, %p49
      %p51 = scmp.ne.s32.totalorder %s40, %s43
      %p52 = scmp.eq.s32.totalorder %s23, 3
      %p53 = por %p51, %p52
      %p54 = scmp.ne.s32.totalorder %s43, %s44
      %p55 = scmp.eq.s32.totalorder %s23, 0
      %p56 = por %p54, %p55
      %p57 = scmp.ne.s32.totalorder %s43, %s44
      %p58 = scmp.eq.s32.totalorder %s24, 3
      %p59 = por %p57, %p58
      %p61 = scmp.ne.s32.totalorder %s44, %s60
      %p62 = scmp.eq.s32.totalorder %s24, 0
      %p63 = por %p61, %p62
      %s65 = sadd.s32 %s64, 1
      %p68 = scmp.eq.s32.totalorder %s18, 3
      %p69 = scmp.ne.s32.totalorder %s64, %s66
      %p70 = scmp.eq.s32.totalorder %s18, 0
      %p71 = por %p69, %p70
      %p72 = scmp.ne.s32.totalorder %s64, %s66
      %p73 = scmp.eq.s32.totalorder %s23, 3
      %p74 = por %p72, %p73
      %p75 = scmp.ne.s32.totalorder %s66, %s67
      %p76 = scmp.eq.s32.totalorder %s23, 0
      %p77 = por %p75, %p76
      %p78 = scmp.ne.s32.totalorder %s66, %s67
      %p79 = scmp.eq.s32.totalorder %s24, 3
      %p80 = por %p78, %p79
      %p82 = scmp.ne.s32.totalorder %s67, %s81
      %p83 = scmp.eq.s32.totalorder %s24, 0
      %p84 = por %p82, %p83
      %s86 = sadd.s32 %s85, 1
      %p89 = scmp.eq.s32.totalorder %s18, 3
      %p90 = scmp.ne.s32.totalorder %s85, %s87
      %p91 = scmp.eq.s32.totalorder %s18, 0
      %p92 = por %p90, %p91
      %p93 = scmp.ne.s32.totalorder %s85, %s87
      %p94 = scmp.eq.s32.totalorder %s23, 3
      %p95 = por %p93, %p94
      %p96 = scmp.ne.s32.totalorder %s87, %s88
      %p97 = scmp.eq.s32.totalorder %s23, 0
      %p98 = por %p96, %p97
      %p99 = scmp.ne.s32.totalorder %s87, %s88
      %p100 = scmp.eq.s32.totalorder %s24, 3
      %p101 = por %p99, %p100
      %p103 = scmp.ne.s32.totalorder %s88, %s102
      %p104 = scmp.eq.s32.totalorder %s24, 0
      %p105 = por %p103, %p104
      %s107 = sadd.s32 %s106, 1
      %p110 = scmp.eq.s32.totalorder %s18, 3
      %p111 = scmp.ne.s32.totalorder %s106, %s108
      %p112 = scmp.eq.s32.totalorder %s18, 0
      %p113 = por %p111, %p112
      %p114 = scmp.ne.s32.totalorder %s106, %s108
      %p115 = scmp.eq.s32.totalorder %s23, 3
      %p116 = por %p114, %p115
      %p117 = scmp.ne.s32.totalorder %s108, %s109
      %p118 = scmp.eq.s32.totalorder %s23, 0
      %p119 = por %p117, %p118
      %p120 = scmp.ne.s32.totalorder %s108, %s109
      %p121 = scmp.eq.s32.totalorder %s24, 3
      %p122 = por %p120, %p121
      %p124 = scmp.ne.s32.totalorder %s109, %s123
      %p125 = scmp.eq.s32.totalorder %s24, 0
      %p126 = por %p124, %p125
      %s128 = sadd.s32 %s127, 1
      %p131 = scmp.eq.s32.totalorder %s18, 3
      %p132 = scmp.ne.s32.totalorder %s127, %s129
      %p133 = scmp.eq.s32.totalorder %s18, 0
      %p134 = por %p132, %p133
      %p135 = scmp.ne.s32.totalorder %s127, %s129
      %p136 = scmp.eq.s32.totalorder %s23, 3
      %p137 = por %p135, %p136
      %p138 = scmp.ne.s32.totalorder %s129, %s130
      %p139 = scmp.eq.s32.totalorder %s23, 0
      %p140 = por %p138, %p139
      %p141 = scmp.ne.s32.totalorder %s129, %s130
      %p142 = scmp.eq.s32.totalorder %s24, 3
      %p143 = por %p141, %p142
      %p145 = scmp.ne.s32.totalorder %s130, %s144
      %p146 = scmp.eq.s32.totalorder %s24, 0
      %p147 = por %p145, %p146
      %s148 = ssub.s32 %s25, %s37
      %s149 = ssub.s32 %s26, %s33
      %s150 = sor.u32 %s148, %s149
      %p151 = scmp.eq.s32.totalorder %s150, 0
      %s153 = sadd.s32 %s152, 1
      %s154 = scalar_select %p151, %s152, %s153
      %p157 = pneg %p151
      %p158 = scmp.eq.s32.totalorder %s18, 3
      %p159 = por %p157, %p158
      %p160 = scmp.ne.s32.totalorder %s152, %s155
      %p161 = scmp.eq.s32.totalorder %s18, 0
      %p162 = por %p160, %p161
      %p163 = scmp.ne.s32.totalorder %s152, %s155
      %p164 = scmp.eq.s32.totalorder %s23, 3
      %p165 = por %p163, %p164
      %p166 = scmp.ne.s32.totalorder %s155, %s156
      %p167 = scmp.eq.s32.totalorder %s23, 0
      %p168 = por %p166, %p167
      %p169 = scmp.ne.s32.totalorder %s155, %s156
      %p170 = scmp.eq.s32.totalorder %s24, 3
      %p171 = por %p169, %p170
      %p173 = scmp.ne.s32.totalorder %s156, %s172
      %p174 = scmp.eq.s32.totalorder %s24, 0
      %p175 = por %p173, %p174
      %p176 = scmp.le.s32.totalorder 1, %s18
      %p177 = scmp.lt.s32.totalorder %s18, 5
      %p178 = pnand %p176, %p177
      %p179 = pneg %p178
      // Predicated region
      $region9: #{tpu_custom_call.1} parent=5 // pred_check
        _
      $region10: #{tpu_custom_call.1} parent=5 // pred_check_branch
        %181 = sbr.rel (%p178) target = $region12
      $region11: #{tpu_custom_call.1} parent=5 // pred_region
        %s182 = ssub.s32 %s18, 1
        // Predicated region
        $region13: #{tpu_custom_call.1} parent=11 // pred_check
          %p183 = pneg %p77
        $region14: #{tpu_custom_call.1} parent=11 // pred_check_branch
          %185 = sbr.rel (%p183) target = $region16
        $region15: #{tpu_custom_call.1} parent=11 // pred_region
          %187 = vsyncadd [#allocation7], 0
          %s188 = sshll.u32 %s1, 4
          %s189 = int_to_ptr.hbm [resolvable:$true] %s188
          %s190 = sshll.u32 [#allocation6], 4
          %s191 = int_to_ptr.vmem [resolvable:$true] %s190
          %196 = dma.hbm_to_vmem [thread:$0]  %s189, 3072, %s191, [#allocation7], 128, 128, 8
        $region16: #{tpu_custom_call.1} parent=11 // pred_fallthru
          _
        // Predicated region
        $region17: #{tpu_custom_call.1} parent=11 // pred_check
          %p197 = pneg %p98
        $region18: #{tpu_custom_call.1} parent=11 // pred_check_branch
          %199 = sbr.rel (%p197) target = $region20
        $region19: #{tpu_custom_call.1} parent=11 // pred_region
          _
        $region20: #{tpu_custom_call.1} parent=11 // pred_fallthru
          _
        // Predicated region
        $region21: #{tpu_custom_call.1} parent=11 // pred_check
          %p200 = pneg %p119
        $region22: #{tpu_custom_call.1} parent=11 // pred_check_branch
          %202 = sbr.rel (%p200) target = $region24
        $region23: #{tpu_custom_call.1} parent=11 // pred_region
          %204 = vsyncadd [#allocation7], 0
          %s205 = sshll.u32 %s3, 4
          %s206 = int_to_ptr.hbm [resolvable:$true] %s205
          %s207 = sshll.u32 [#allocation8], 4
          %s208 = int_to_ptr.vmem [resolvable:$true] %s207
          %213 = dma.hbm_to_vmem [thread:$0]  %s206, 6144, %s208, [#allocation7], 128, 128, 8
        $region24: #{tpu_custom_call.1} parent=11 // pred_fallthru
          _
        // Predicated region
        $region25: #{tpu_custom_call.1} parent=11 // pred_check
          %p214 = pneg %p140
        $region26: #{tpu_custom_call.1} parent=11 // pred_check_branch
          %216 = sbr.rel (%p214) target = $region28
        $region27: #{tpu_custom_call.1} parent=11 // pred_region
          _
        $region28: #{tpu_custom_call.1} parent=11 // pred_fallthru
          _
      $region12: #{tpu_custom_call.1} parent=5 // pred_fallthru
        _
      %p217 = scmp.lt.s32.totalorder %s18, 4
      // Predicated region
      $region29: #{tpu_custom_call.1} parent=5 // pred_check
        %p218 = pneg %p217
      $region30: #{tpu_custom_call.1} parent=5 // pred_check_branch
        %220 = sbr.rel (%p218) target = $region32
      $region31: #{tpu_custom_call.1} parent=5 // pred_region
        // Predicated region
        $region33: #{tpu_custom_call.1} parent=31 // pred_check
          %p221 = pneg %p50
        $region34: #{tpu_custom_call.1} parent=31 // pred_check_branch
          %223 = sbr.rel (%p221) target = $region36
        $region35: #{tpu_custom_call.1} parent=31 // pred_region
          %s224 = sand.u32 %s40, 1
          %s225 = scalar_lea.sflag [#allocation4], %s224
          %s226 = sand.u32 %s40, 1
          %s227 = smul.addr %s226, 16
          %s228 = scalar_lea.vmem [#allocation3], %s227
          %230 = vsyncadd %s225, 0
          %s231 = smul.addr %s25, 2
          %s232 = smul.addr %s231, 8
          %s233 = scalar_lea.hbm %s0, %s232
          %s234 = sshll.u32 %s233, 4
          %s235 = int_to_ptr.hbm [resolvable:$true] %s234
          %s236 = sshll.u32 %s228, 4
          %s237 = int_to_ptr.vmem [resolvable:$true] %s236
          %242 = dma.hbm_to_vmem [thread:$0]  %s235, 256, %s237, %s225, 128, 128, 8
        $region36: #{tpu_custom_call.1} parent=31 // pred_fallthru
          _
      $region32: #{tpu_custom_call.1} parent=5 // pred_fallthru
        _
      %p243 = scmp.le.s32.totalorder 1, %s18
      %p244 = scmp.lt.s32.totalorder %s18, 5
      %p245 = pnand %p243, %p244
      %p246 = pneg %p245
      // Predicated region
      $region37: #{tpu_custom_call.1} parent=5 // pred_check
        _
      $region38: #{tpu_custom_call.1} parent=5 // pred_check_branch
        %248 = sbr.rel (%p245) target = $region40
      $region39: #{tpu_custom_call.1} parent=5 // pred_region
        %s249 = ssub.s32 %s18, 1
        %s250 = sand.u32 %s43, 1
        %s251 = scalar_lea.sflag [#allocation4], %s250
        %s252 = sand.u32 %s43, 1
        %s253 = smul.addr %s252, 16
        %s254 = scalar_lea.vmem [#allocation3], %s253
        // Predicated region
        $region41: #{tpu_custom_call.1} parent=39 // pred_check
          %p255 = pneg %p56
        $region42: #{tpu_custom_call.1} parent=39 // pred_check_branch
          %257 = sbr.rel (%p255) target = $region44
        $region43: #{tpu_custom_call.1} parent=39 // pred_region
          %259 = dma.done %s251, 256
        $region44: #{tpu_custom_call.1} parent=39 // pred_fallthru
          _
        // Predicated region
        $region45: #{tpu_custom_call.1} parent=39 // pred_check
          %p260 = pneg %p77
        $region46: #{tpu_custom_call.1} parent=39 // pred_check_branch
          %262 = sbr.rel (%p260) target = $region48
        $region47: #{tpu_custom_call.1} parent=39 // pred_region
          %264 = dma.done [#allocation7], 3072
        $region48: #{tpu_custom_call.1} parent=39 // pred_fallthru
          _
        // Predicated region
        $region49: #{tpu_custom_call.1} parent=39 // pred_check
          %p265 = pneg %p119
        $region50: #{tpu_custom_call.1} parent=39 // pred_check_branch
          %267 = sbr.rel (%p265) target = $region52
        $region51: #{tpu_custom_call.1} parent=39 // pred_region
          %269 = dma.done [#allocation7], 6144
        $region52: #{tpu_custom_call.1} parent=39 // pred_fallthru
          _
        %s270 = sand.u32 %s43, 1
        %s271 = scalar_lea.sflag [#allocation4], %s270
        %s272 = sand.u32 %s43, 1
        %s273 = smul.addr %s272, 16
        %s274 = scalar_lea.vmem [#allocation3], %s273
        %p275 = pneg %p56
        %p276 = pneg %p53
        %p277 = pneg %p77
        %p278 = pneg %p74
        %p279 = pneg %p98
        %p280 = pneg %p95
        %p281 = pneg %p119
        %p282 = pneg %p116
        %p283 = pneg %p140
        %p284 = pneg %p137
        %p285 = pneg %p168
        %p286 = pneg %p165
        %s287 = sand.u32 %s155, 1
        %s288 = scalar_lea.sflag [#allocation5], %s287
        %s289 = sand.u32 %s155, 1
        %s290 = smul.addr %s289, 8
        %s291 = scalar_lea.vmem [#allocation9], %s290
        %p292 = scmp.eq.s32.totalorder %s28, 0
        // Predicated region
        $region53: #{tpu_custom_call.1} parent=39 // pred_check
          %p293 = pneg %p292
        $region54: #{tpu_custom_call.1} parent=39 // pred_check_branch
          %295 = sbr.rel (%p293) target = $region56
        $region55: #{tpu_custom_call.1} parent=39 // pred_region
          %vm296 = vcmask 523264
          %297 = vst.msk [vmem:[#allocation2] sm:$0xff] %vm296, 0.0
          %298 = vst.msk [vmem:[#allocation2 + $0x18] sm:$0xff] %vm296, 0.0
          %v299 = vld [vmem:[%s254] sm:$0xff]
          %v300 = vld [vmem:[%s254 + $0x8] sm:$0xff]
          %301 = vst.msk [vmem:[#allocation2 + $0x8] sm:$0xff] %vm296, %v299
          %302 = vst.msk [vmem:[#allocation2 + $0x10] sm:$0xff] %vm296, %v300
        $region56: #{tpu_custom_call.1} parent=39 // pred_fallthru
          _
        %s303 = smul.u32 %s28, 8
        %s304 = sadd.s32 %s303, 8
        %s305 = sadd.s32 %s303, 6
        %s306 = scalar_lea.vmem [#allocation2], %s305
        %v307 = vld [vmem:[%s306] sm:$0xff]
        %v308 = vld [vmem:[%s306 + $0x8] sm:$0x3]
        %v309 = vld [vmem:[#allocation6] sm:$0xff]
        %v310 = vld [vmem:[#allocation6 + $0x8] sm:$0xff]
        %v311 = vld [vmem:[#allocation6 + $0x10] sm:$0xff]
        %v312 = vld [vmem:[#allocation6 + $0x18] sm:$0xff]
        %v313 = vld [vmem:[#allocation6 + $0x20] sm:$0xff]
        %v314 = vld [vmem:[#allocation6 + $0x28] sm:$0xff]
        %v315 = vld [vmem:[#allocation6 + $0x30] sm:$0xff]
        %v316 = vld [vmem:[#allocation6 + $0x38] sm:$0xff]
        %s317 = sadd.s32 %s303, 7
        %s318 = scalar_lea.vmem [#allocation2], %s317
        %v319 = vld [vmem:[%s318] sm:$0xff]
        %v320 = vld [vmem:[%s318 + $0x8] sm:$0x3]
        %s321 = scalar_lea.vmem [#allocation6], 64
        %v322 = vld [vmem:[%s321] sm:$0xff]
        %v323 = vld [vmem:[%s321 + $0x8] sm:$0xff]
        %v324 = vld [vmem:[%s321 + $0x10] sm:$0xff]
        %v325 = vld [vmem:[%s321 + $0x18] sm:$0xff]
        %v326 = vld [vmem:[%s321 + $0x20] sm:$0xff]
        %v327 = vld [vmem:[%s321 + $0x28] sm:$0xff]
        %v328 = vld [vmem:[%s321 + $0x30] sm:$0xff]
        %v329 = vld [vmem:[%s321 + $0x38] sm:$0xff]
        %vm330 = vcmask 523264
        %v332 = vsel %vm330, %v319, 0
        %v335 = vsel %vm330, %v320, 0
        %337 = vmatpush.msra.mxu0 0.0
        %338 = vmatpush.msra.mxu0 0.0
        %339 = vmatpush.msra.mxu0 0.0
        %340 = vmatpush.msra.mxu0 0.0
        %341 = vmatpush.msra.mxu0 0.0
        %342 = vmatpush.msra.mxu0 0.0
        %343 = vmatpush.msra.mxu0 0.0
        %344 = vmatpush.msra.mxu0 0.0
        %345 = vmatpush.msra.mxu0 %v329
        %346 = vmatpush.msra.mxu0 %v328
        %347 = vmatpush.msra.mxu0 %v327
        %348 = vmatpush.msra.mxu0 %v326
        %349 = vmatpush.msra.mxu0 %v325
        %350 = vmatpush.msra.mxu0 %v324
        %351 = vmatpush.msra.mxu0 %v323
        %352 = vmatpush.msra.mxu0 %v322
        %353 = vmatmul.f32.gmra.mxu0 %v332
        %v354 = vpop.f32.mrf.mxu0
        %v355 = vadd.f32 0.0, %v354
        %356 = vmatmul.f32.gmra.mxu0 %v335
        %v357 = vpop.f32.mrf.mxu0
        %v358 = vadd.f32 0.0, %v357
        %359 = vdwg.mxu0
        %v361 = vsel %vm330, %v307, 0
        %v364 = vsel %vm330, %v308, 0
        %366 = vmatpush.msra.mxu0 0.0
        %367 = vmatpush.msra.mxu0 0.0
        %368 = vmatpush.msra.mxu0 0.0
        %369 = vmatpush.msra.mxu0 0.0
        %370 = vmatpush.msra.mxu0 0.0
        %371 = vmatpush.msra.mxu0 0.0
        %372 = vmatpush.msra.mxu0 0.0
        %373 = vmatpush.msra.mxu0 0.0
        %374 = vmatpush.msra.mxu0 %v316
        %375 = vmatpush.msra.mxu0 %v315
        %376 = vmatpush.msra.mxu0 %v314
        %377 = vmatpush.msra.mxu0 %v313
        %378 = vmatpush.msra.mxu0 %v312
        %379 = vmatpush.msra.mxu0 %v311
        %380 = vmatpush.msra.mxu0 %v310
        %381 = vmatpush.msra.mxu0 %v309
        %382 = vmatmul.f32.gmra.mxu0 %v361
        %v383 = vpop.f32.mrf.mxu0
        %v384 = vadd.f32 %v355, %v383
        %385 = vmatmul.f32.gmra.mxu0 %v364
        %v386 = vpop.f32.mrf.mxu0
        %v387 = vadd.f32 %v358, %v386
        %388 = vdwg.mxu0
        %s389 = scalar_lea.vmem [#allocation2], %s304
        %v390 = vld [vmem:[%s389] sm:$0xff]
        %v391 = vld [vmem:[%s389 + $0x8] sm:$0x3]
        %s392 = scalar_lea.vmem [#allocation6], 128
        %v393 = vld [vmem:[%s392] sm:$0xff]
        %v394 = vld [vmem:[%s392 + $0x8] sm:$0xff]
        %v395 = vld [vmem:[%s392 + $0x10] sm:$0xff]
        %v396 = vld [vmem:[%s392 + $0x18] sm:$0xff]
        %v397 = vld [vmem:[%s392 + $0x20] sm:$0xff]
        %v398 = vld [vmem:[%s392 + $0x28] sm:$0xff]
        %v399 = vld [vmem:[%s392 + $0x30] sm:$0xff]
        %v400 = vld [vmem:[%s392 + $0x38] sm:$0xff]
        %v402 = vsel %vm330, %v390, 0
        %v405 = vsel %vm330, %v391, 0
        %407 = vmatpush.msra.mxu0 0.0
        %408 = vmatpush.msra.mxu0 0.0
        %409 = vmatpush.msra.mxu0 0.0
        %410 = vmatpush.msra.mxu0 0.0
        %411 = vmatpush.msra.mxu0 0.0
        %412 = vmatpush.msra.mxu0 0.0
        %413 = vmatpush.msra.mxu0 0.0
        %414 = vmatpush.msra.mxu0 0.0
        %415 = vmatpush.msra.mxu0 %v400
        %416 = vmatpush.msra.mxu0 %v399
        %417 = vmatpush.msra.mxu0 %v398
        %418 = vmatpush.msra.mxu0 %v397
        %419 = vmatpush.msra.mxu0 %v396
        %420 = vmatpush.msra.mxu0 %v395
        %421 = vmatpush.msra.mxu0 %v394
        %422 = vmatpush.msra.mxu0 %v393
        %423 = vmatmul.f32.gmra.mxu0 %v402
        %v424 = vpop.f32.mrf.mxu0
        %v425 = vadd.f32 0.0, %v424
        %426 = vmatmul.f32.gmra.mxu0 %v405
        %v427 = vpop.f32.mrf.mxu0
        %v428 = vadd.f32 0.0, %v427
        %429 = vdwg.mxu0
        %v430 = vadd.f32 %v384, %v425
        %v431 = vadd.f32 %v387, %v428
        %s432 = ssub.s32 %s303, 1
        %v433 = vlaneseq
        %v434 = vshrl.u32 %v433, 7
        %v435 = vadd.s32 %v434, 8
        %v436 = vstv %s432
        %v437 = vadd.s32 %v436, %v434
        %v438 = vadd.s32 %v436, %v435
        %vm439 = vcmp.ge.s32.totalorder %v437, 0
        %vm440 = vcmp.ge.s32.totalorder %v438, 0
        %vm441 = vcmp.lt.s32.totalorder %v437, 16
        %vm442 = vcmp.lt.s32.totalorder %v438, 16
        %vm443 = vmand %vm439, %vm441
        %vm444 = vmand %vm440, %vm442
        %v445 = vld [vmem:[%s2] sm:$0x1]
        %v447 = vperm.slane %v445, 0
        %v449 = vadd.f32 %v430, %v447
        %v450 = vadd.f32 %v431, %v447
        %v451 = vmax.f32 %v449, 0.0
        %v452 = vmax.f32 %v450, 0.0
        %v453 = vsel %vm443, 1, 0
        %v454 = vsel %vm444, 1, 0
        %vm455 = vcmp.eq.s32.totalorder %v453, 1
        %vm456 = vcmp.eq.s32.totalorder %v454, 1
        %v457 = vsel %vm455, %v451, 0.0
        %v458 = vsel %vm456, %v452, 0.0
        %v459 = vld [vmem:[#allocation8] sm:$0xff]
        %v460 = vld [vmem:[#allocation8 + $0x8] sm:$0xff]
        %v461 = vld [vmem:[#allocation8 + $0x10] sm:$0xff]
        %v462 = vld [vmem:[#allocation8 + $0x18] sm:$0xff]
        %v463 = vld [vmem:[#allocation8 + $0x20] sm:$0xff]
        %v464 = vld [vmem:[#allocation8 + $0x28] sm:$0xff]
        %v465 = vld [vmem:[#allocation8 + $0x30] sm:$0xff]
        %v466 = vld [vmem:[#allocation8 + $0x38] sm:$0xff]
        %v467 = vld [vmem:[#allocation8 + $0x40] sm:$0xff]
        %v468 = vld [vmem:[#allocation8 + $0x48] sm:$0xff]
        %v469 = vld [vmem:[#allocation8 + $0x50] sm:$0xff]
        %v470 = vld [vmem:[#allocation8 + $0x58] sm:$0xff]
        %v471 = vld [vmem:[#allocation8 + $0x60] sm:$0xff]
        %v472 = vld [vmem:[#allocation8 + $0x68] sm:$0xff]
        %v473 = vld [vmem:[#allocation8 + $0x70] sm:$0xff]
        %v474 = vld [vmem:[#allocation8 + $0x78] sm:$0xff]
        %s475 = scalar_lea.vmem [#allocation8], 128
        %v476 = vld [vmem:[%s475] sm:$0xff]
        %v477 = vld [vmem:[%s475 + $0x8] sm:$0xff]
        %v478 = vld [vmem:[%s475 + $0x10] sm:$0xff]
        %v479 = vld [vmem:[%s475 + $0x18] sm:$0xff]
        %v480 = vld [vmem:[%s475 + $0x20] sm:$0xff]
        %v481 = vld [vmem:[%s475 + $0x28] sm:$0xff]
        %v482 = vld [vmem:[%s475 + $0x30] sm:$0xff]
        %v483 = vld [vmem:[%s475 + $0x38] sm:$0xff]
        %v484 = vld [vmem:[%s475 + $0x40] sm:$0xff]
        %v485 = vld [vmem:[%s475 + $0x48] sm:$0xff]
        %v486 = vld [vmem:[%s475 + $0x50] sm:$0xff]
        %v487 = vld [vmem:[%s475 + $0x58] sm:$0xff]
        %v488 = vld [vmem:[%s475 + $0x60] sm:$0xff]
        %v489 = vld [vmem:[%s475 + $0x68] sm:$0xff]
        %v490 = vld [vmem:[%s475 + $0x70] sm:$0xff]
        %v491 = vld [vmem:[%s475 + $0x78] sm:$0xff]
        %vm494 = vcmask 1046528
        %v495 = vrot.slane %v457, 1
        %v496 = vrot.slane %v458, 1
        %v497 = vsel %vm494, %v495, %v496
        %499 = vmatpush.msra.mxu0 %v491
        %500 = vmatpush.msra.mxu0 %v490
        %501 = vmatpush.msra.mxu0 %v489
        %502 = vmatpush.msra.mxu0 %v488
        %503 = vmatpush.msra.mxu0 %v487
        %504 = vmatpush.msra.mxu0 %v486
        %505 = vmatpush.msra.mxu0 %v485
        %506 = vmatpush.msra.mxu0 %v484
        %507 = vmatpush.msra.mxu0 %v483
        %508 = vmatpush.msra.mxu0 %v482
        %509 = vmatpush.msra.mxu0 %v481
        %510 = vmatpush.msra.mxu0 %v480
        %511 = vmatpush.msra.mxu0 %v479
        %512 = vmatpush.msra.mxu0 %v478
        %513 = vmatpush.msra.mxu0 %v477
        %514 = vmatpush.msra.mxu0 %v476
        %515 = vmatmul.f32.gmra.mxu0 %v497
        %v516 = vpop.f32.mrf.mxu0
        %v517 = vadd.f32 0.0, %v516
        %518 = vdwg.mxu0
        %519 = vmatpush.msra.mxu0 %v474
        %520 = vmatpush.msra.mxu0 %v473
        %521 = vmatpush.msra.mxu0 %v472
        %522 = vmatpush.msra.mxu0 %v471
        %523 = vmatpush.msra.mxu0 %v470
        %524 = vmatpush.msra.mxu0 %v469
        %525 = vmatpush.msra.mxu0 %v468
        %526 = vmatpush.msra.mxu0 %v467
        %527 = vmatpush.msra.mxu0 %v466
        %528 = vmatpush.msra.mxu0 %v465
        %529 = vmatpush.msra.mxu0 %v464
        %530 = vmatpush.msra.mxu0 %v463
        %531 = vmatpush.msra.mxu0 %v462
        %532 = vmatpush.msra.mxu0 %v461
        %533 = vmatpush.msra.mxu0 %v460
        %534 = vmatpush.msra.mxu0 %v459
        %535 = vmatmul.f32.gmra.mxu0 %v457
        %v536 = vpop.f32.mrf.mxu0
        %v537 = vadd.f32 %v517, %v536
        %538 = vdwg.mxu0
        %s539 = scalar_lea.vmem [#allocation8], 256
        %v540 = vld [vmem:[%s539] sm:$0xff]
        %v541 = vld [vmem:[%s539 + $0x8] sm:$0xff]
        %v542 = vld [vmem:[%s539 + $0x10] sm:$0xff]
        %v543 = vld [vmem:[%s539 + $0x18] sm:$0xff]
        %v544 = vld [vmem:[%s539 + $0x20] sm:$0xff]
        %v545 = vld [vmem:[%s539 + $0x28] sm:$0xff]
        %v546 = vld [vmem:[%s539 + $0x30] sm:$0xff]
        %v547 = vld [vmem:[%s539 + $0x38] sm:$0xff]
        %v548 = vld [vmem:[%s539 + $0x40] sm:$0xff]
        %v549 = vld [vmem:[%s539 + $0x48] sm:$0xff]
        %v550 = vld [vmem:[%s539 + $0x50] sm:$0xff]
        %v551 = vld [vmem:[%s539 + $0x58] sm:$0xff]
        %v552 = vld [vmem:[%s539 + $0x60] sm:$0xff]
        %v553 = vld [vmem:[%s539 + $0x68] sm:$0xff]
        %v554 = vld [vmem:[%s539 + $0x70] sm:$0xff]
        %v555 = vld [vmem:[%s539 + $0x78] sm:$0xff]
        %vm556 = vcmask 1045504
        %v557 = vrot.slane %v457, 2
        %v558 = vrot.slane %v458, 2
        %v559 = vsel %vm556, %v557, %v558
        %561 = vmatpush.msra.mxu0 %v555
        %562 = vmatpush.msra.mxu0 %v554
        %563 = vmatpush.msra.mxu0 %v553
        %564 = vmatpush.msra.mxu0 %v552
        %565 = vmatpush.msra.mxu0 %v551
        %566 = vmatpush.msra.mxu0 %v550
        %567 = vmatpush.msra.mxu0 %v549
        %568 = vmatpush.msra.mxu0 %v548
        %569 = vmatpush.msra.mxu0 %v547
        %570 = vmatpush.msra.mxu0 %v546
        %571 = vmatpush.msra.mxu0 %v545
        %572 = vmatpush.msra.mxu0 %v544
        %573 = vmatpush.msra.mxu0 %v543
        %574 = vmatpush.msra.mxu0 %v542
        %575 = vmatpush.msra.mxu0 %v541
        %576 = vmatpush.msra.mxu0 %v540
        %577 = vmatmul.f32.gmra.mxu0 %v559
        %v578 = vpop.f32.mrf.mxu0
        %v579 = vadd.f32 0.0, %v578
        %580 = vdwg.mxu0
        %v581 = vadd.f32 %v537, %v579
        %v582 = vld [vmem:[%s4] sm:$0x1]
        %v584 = vperm.slane %v582, 0
        %v586 = vadd.f32 %v581, %v584
        %v587 = vmax.f32 %v586, 0.0
        %588 = vst [vmem:[%s291] sm:$0xff] %v587
        %s589 = sand.u32 %s155, 1
        %s590 = scalar_lea.sflag [#allocation5], %s589
        %s591 = sand.u32 %s155, 1
        %s592 = smul.addr %s591, 8
        %s593 = scalar_lea.vmem [#allocation9], %s592
        // Predicated region
        $region57: #{tpu_custom_call.1} parent=39 // pred_check
          %p594 = pneg %p165
        $region58: #{tpu_custom_call.1} parent=39 // pred_check_branch
          %596 = sbr.rel (%p594) target = $region60
        $region59: #{tpu_custom_call.1} parent=39 // pred_region
          %598 = vsyncadd %s590, 0
          %s599 = smul.addr %s27, 2
          %s600 = sadd.s32 %s28, %s599
          %s601 = smul.addr %s600, 8
          %s602 = scalar_lea.hbm %s5, %s601
          %s604 = sshll.u32 %s593, 4
          %s605 = int_to_ptr.vmem [resolvable:$true] %s604
          %s606 = sshll.u32 %s602, 4
          %s607 = int_to_ptr.hbm [resolvable:$true] %s606
          %609 = dma.vmem_to_hbm [thread:$0]  %s605, 128, %s607, %s590
        $region60: #{tpu_custom_call.1} parent=39 // pred_fallthru
          _
      $region40: #{tpu_custom_call.1} parent=5 // pred_fallthru
        _
      %p610 = scmp.le.s32.totalorder 2, %s18
      // Predicated region
      $region61: #{tpu_custom_call.1} parent=5 // pred_check
        %p611 = pneg %p610
      $region62: #{tpu_custom_call.1} parent=5 // pred_check_branch
        %613 = sbr.rel (%p611) target = $region64
      $region63: #{tpu_custom_call.1} parent=5 // pred_region
        %s614 = ssub.s32 %s18, 2
        // Predicated region
        $region65: #{tpu_custom_call.1} parent=63 // pred_check
          %p615 = pneg %p171
        $region66: #{tpu_custom_call.1} parent=63 // pred_check_branch
          %617 = sbr.rel (%p615) target = $region68
        $region67: #{tpu_custom_call.1} parent=63 // pred_region
          %s618 = sand.u32 %s156, 1
          %s619 = scalar_lea.sflag [#allocation5], %s618
          %s620 = sand.u32 %s156, 1
          %s621 = smul.addr %s620, 8
          %s622 = scalar_lea.vmem [#allocation9], %s621
          %624 = dma.done %s619, 128
        $region68: #{tpu_custom_call.1} parent=63 // pred_fallthru
          _
      $region64: #{tpu_custom_call.1} parent=5 // pred_fallthru
        _
    $region6: #{tpu_custom_call.1} parent=1 // loop_footer
      %s22 = sadd.s32 1, %s18
    $region7: #{tpu_custom_call.1} parent=1 // loop_footer_branch
      %17 = sbr.rel target = $region3
    $region8: #{tpu_custom_call.1} parent=1 // loop_exit
      _
    %625 = vsyncpa [#allocation4], 1
    %s626 = scalar_lea.sflag [#allocation4], 1
    %627 = vsyncpa %s626, 1
    %628 = vsyncpa [#allocation7], 1
    %629 = vsyncpa [#allocation5], 1
    %s630 = scalar_lea.sflag [#allocation5], 1
    %631 = vsyncpa %s630, 1

</llo_original>
